<compile_context>
chip_gen: v6e
topology: v6e:2x2x1
jax: 0.10.0
libtpu: 0.0.40
codegen_flags: <defaults>
</compile_context>

<pallas_src>
import jax
import jax.numpy as jnp
from jax.experimental import pallas as pl
from jax.experimental.pallas import tpu as pltpu


SELU_ALPHA = 1.6732632423543772848170429916717
SELU_SCALE = 1.0507009873554804934193349852946


def _round_up(x, m):
    return ((x + m - 1) // m) * m


def _cbow_kernel(ids_ref, emb_ref, w_ref, b_ref, out_ref, acc_ref):
    # Grid: (batch tiles [parallel], vocab chunks [arbitrary, reduction]).
    k = pl.program_id(1)
    n_k = pl.num_programs(1)

    @pl.when(k == 0)
    def _():
        acc_ref[...] = jnp.zeros_like(acc_ref)

    tm, seq_len = ids_ref.shape
    vk = emb_ref.shape[0]
    base = k * vk                       # first vocab id covered by this chunk

    # Bag-of-words counts for this vocab chunk:
    #   counts[m, v] = #{l : ids[m, l] == base + v}
    # Accumulate the compares in int32; single cast to bf16 after the loop.
    vocab_iota = jax.lax.broadcasted_iota(jnp.int32, (tm, vk), 1)
    if seq_len <= 16:
        # Short static L: unroll at trace time.
        ids_local = ids_ref[...] - base
        counts_i = jnp.zeros((tm, vk), jnp.int32)
        for l in range(seq_len):
            counts_i = counts_i + (vocab_iota == ids_local[:, l:l + 1])
    else:
        # Long L: bounded-body loop keeps vreg pressure down.
        def body(l, c):
            tok = ids_ref[:, pl.ds(l, 1)] - base
            return c + (vocab_iota == tok)
        counts_i = jax.lax.fori_loop(0, seq_len, body,
                                     jnp.zeros((tm, vk), jnp.int32), unroll=4)

    # Counts <= L (<= 256) are exact in bf16.
    counts = counts_i.astype(jnp.bfloat16)

    # Partial bag sum on the MXU (bf16 x bf16 -> f32 accumulate):
    #   sum_l emb[ids[m, l]] == sum_chunks counts_chunk @ emb_chunk.
    acc_ref[...] += jnp.dot(counts, emb_ref[...],
                            preferred_element_type=jnp.float32)

    @pl.when(k == n_k - 1)
    def _():
        s = acc_ref[...]
        # SELU (safe exp: never evaluates exp of a large positive value).
        act = SELU_SCALE * jnp.where(
            s > 0.0, s, SELU_ALPHA * (jnp.exp(jnp.minimum(s, 0.0)) - 1.0))
        # Projection: (TM, D) @ (D, T) on the MXU, bf16 inputs, f32 acc.
        out = jnp.dot(act.astype(jnp.bfloat16), w_ref[...],
                      preferred_element_type=jnp.float32)
        out_ref[...] = (out + b_ref[...]).astype(out_ref.dtype)


def cbow_forward(input_text, emb_table, proj_w, proj_b, *, tm=None, vk=512):
    """input_text: (B, ...) int; emb_table: (V, D); proj_w: (T, D); proj_b: (T,).

    tm: batch tile (default min(256, B rounded to 8); use 128 on v5e).
    vk: vocab chunk size (lane-aligned; rows of the table streamed per step).
    """
    B = input_text.shape[0]
    ids = input_text.reshape(B, -1).astype(jnp.int32)      # .view(B, -1)
    L = ids.shape[1]
    V, D = emb_table.shape
    T = proj_w.shape[0]

    # Lane-align feature / target dims so all stores are unmasked and the MXU
    # sees full tiles.  Padded columns are zero and contribute nothing
    # (SELU(0) == 0; padded weight rows are zero).
    Dp = _round_up(D, 128)
    Tp = _round_up(T, 128)

    # Vocab chunking (reduction axis).  Padded vocab rows are zero and never
    # selected (ids < V), so they contribute nothing.
    VK = min(_round_up(vk, 128), _round_up(V, 128))
    Vp = _round_up(V, VK)
    n_k = Vp // VK

    # Batch tile: 256 fills the 256-wide v6e/v7x MXU; pass tm=128 on v5e.
    if tm is None:
        tm = 256
    TM = min(_round_up(tm, 8), _round_up(B, 8))
    Bp = _round_up(B, TM)

    ids_p = jnp.pad(ids, ((0, Bp - B), (0, 0))) if Bp != B else ids

    emb = emb_table
    if (Vp, Dp) != (V, D):
        emb = jnp.pad(emb, ((0, Vp - V), (0, Dp - D)))
    emb = emb.astype(jnp.bfloat16)           # bf16 table: MXU-native, half DMA

    w_t = proj_w.T                           # one-time transpose -> (D, T)
    if (Dp, Tp) != (D, T):
        w_t = jnp.pad(w_t, ((0, Dp - D), (0, Tp - T)))
    w_t = w_t.astype(jnp.bfloat16)

    bias = proj_b if Tp == T else jnp.pad(proj_b, (0, Tp - T))
    bias = bias.reshape(1, Tp).astype(jnp.float32)

    # Explicit VMEM budget: double-buffered operands + f32 accumulator +
    # (TM, VK) counts intermediate, plus headroom for compiler scratch.
    vmem_bytes = (
        2 * (TM * L * 4            # ids tile
             + VK * Dp * 2         # emb chunk (bf16)
             + Dp * Tp * 2         # projection weight (bf16)
             + Tp * 4              # bias row
             + TM * Tp * 4)        # output tile
        + TM * Dp * 4              # f32 accumulator scratch
        + TM * VK * 4)             # counts intermediate
    vmem_limit = int(min(vmem_bytes + (16 << 20), 100 << 20))

    out = pl.pallas_call(
        _cbow_kernel,
        out_shape=jax.ShapeDtypeStruct((Bp, Tp), jnp.float32),
        grid_spec=pltpu.PrefetchScalarGridSpec(
            num_scalar_prefetch=0,
            grid=(Bp // TM, n_k),
            in_specs=[
                pl.BlockSpec((TM, L), lambda i, k: (i, 0)),    # token ids tile
                pl.BlockSpec((VK, Dp), lambda i, k: (k, 0)),   # table chunk
                pl.BlockSpec((Dp, Tp), lambda i, k: (0, 0)),   # proj weight (D,T)
                pl.BlockSpec((1, Tp), lambda i, k: (0, 0)),    # bias row
            ],
            out_specs=pl.BlockSpec((TM, Tp), lambda i, k: (i, 0)),
            scratch_shapes=[pltpu.VMEM((TM, Dp), jnp.float32)],
        ),
        compiler_params=pltpu.CompilerParams(
            dimension_semantics=("parallel", "arbitrary"),
            vmem_limit_bytes=vmem_limit),
    )(ids_p, emb, w_t, bias)
    return out[:B, :T]


def cbow_reference(input_text, emb_table, proj_w, proj_b):
    B = input_text.shape[0]
    ids = input_text.reshape(B, -1)
    x = emb_table[ids]                                     # (B, L, D)
    x = jnp.sum(x, axis=1)                                 # (B, D)
    x = SELU_SCALE * jnp.where(
        x > 0.0, x, SELU_ALPHA * (jnp.exp(jnp.minimum(x, 0.0)) - 1.0))
    return x @ proj_w.T + proj_b


if __name__ == "__main__":
    # Small, deterministic config.
    vocab_size, img_feat_size, target_size = 32, 128, 128
    batch, seq = 2, 8

    key = jax.random.PRNGKey(0)
    k_emb, k_w, k_b, k_ids = jax.random.split(key, 4)

    emb_table = jax.random.normal(k_emb, (vocab_size, img_feat_size),
                                  dtype=jnp.float32) * 0.1
    # padding_idx=0 -> row 0 is zero (as torch.nn.Embedding initializes it).
    emb_table = emb_table.at[0].set(0.0)

    proj_w = jax.random.normal(k_w, (target_size, img_feat_size),
                               dtype=jnp.float32) * 0.1
    proj_b = jax.random.normal(k_b, (target_size,), dtype=jnp.float32) * 0.1

    input_text = jax.random.randint(k_ids, (batch, seq), 0, vocab_size,
                                    dtype=jnp.int32)

    out = cbow_forward(input_text, emb_table, proj_w, proj_b)
    out = jax.block_until_ready(out)

    ref = cbow_reference(input_text, emb_table, proj_w, proj_b)
    assert out.shape == (batch, target_size)
    # Tolerance sized for bf16-rounded weights/table (counts stay exact).
    err = float(jnp.max(jnp.abs(out - ref)))
    scale = float(jnp.maximum(jnp.max(jnp.abs(ref)), 1.0))
    assert err < 2e-2 * scale, f"mismatch vs reference: abs {err}, scale {scale}"

    print("KERNEL_OK")
</pallas_src>

<mosaic_0001>
module attributes {stable_mosaic.version = 11 : i64} {
  func.func @_cbow_kernel(%arg0: i32, %arg1: i32, %arg2: memref<8x8xi32, #tpu.memory_space<vmem>>, %arg3: memref<128x128xbf16, #tpu.memory_space<vmem>>, %arg4: memref<128x128xbf16, #tpu.memory_space<vmem>>, %arg5: memref<1x128xf32, #tpu.memory_space<vmem>>, %arg6: memref<8x128xf32, #tpu.memory_space<vmem>>, %arg7: memref<8x128xf32, #tpu.memory_space<vmem>>) attributes {dimension_semantics = [#tpu.dimension_semantics<parallel>, #tpu.dimension_semantics<arbitrary>], iteration_bounds = array<i64: 1, 1>, scalar_prefetch = 0 : i64, scratch_operands = 1 : i64, tpu.core_type = #tpu.core_type<tc>, window_params = [{transform_indices = @transform_0, window_bounds = array<i64: 8, 8>}, {transform_indices = @transform_1, window_bounds = array<i64: 128, 128>}, {pipeline_mode = #tpu.pipeline_mode<synchronous>, transform_indices = @transform_2, window_bounds = array<i64: 128, 128>}, {pipeline_mode = #tpu.pipeline_mode<synchronous>, transform_indices = @transform_3, window_bounds = array<i64: 1, 128>}, {transform_indices = @transform_4, window_bounds = array<i64: 8, 128>}]} {
    %c0_i32 = arith.constant 0 : i32
    %0 = arith.cmpi eq, %arg1, %c0_i32 : i32
    %1 = arith.extui %0 : i1 to i32
    %c0_i32_0 = arith.constant 0 : i32
    %2 = arith.cmpi ne, %1, %c0_i32_0 : i32
    scf.if %2 {
      %cst_11 = arith.constant 0.000000e+00 : f32
      %58 = vector.broadcast %cst_11 : f32 to vector<8x128xf32>
      %c0_12 = arith.constant 0 : index
      %c0_13 = arith.constant 0 : index
      %59 = vector.load %arg7[%c0_12, %c0_13] : memref<8x128xf32, #tpu.memory_space<vmem>>, vector<8x128xf32>
      tpu.vector_store %arg7[%c0_12, %c0_13], %58 {strides = array<i32>} : memref<8x128xf32, #tpu.memory_space<vmem>>, vector<8x128xf32>,
    } else {
    }
    %c128_i32 = arith.constant 128 : i32
    %3 = arith.muli %arg1, %c128_i32 : i32
    %4 = tpu.iota {dimensions = array<i32: 1>} : vector<8x128xi32>
    %c0 = arith.constant 0 : index
    %c0_1 = arith.constant 0 : index
    %5 = vector.load %arg2[%c0, %c0_1] : memref<8x8xi32, #tpu.memory_space<vmem>>, vector<8x8xi32>
    %6 = vector.broadcast %3 : i32 to vector<8x8xi32>
    %7 = arith.subi %5, %6 : vector<8x8xi32>
    %c0_i32_2 = arith.constant 0 : i32
    %8 = vector.broadcast %c0_i32_2 : i32 to vector<8x128xi32>
    %9 = vector.extract_strided_slice %7 {offsets = [0, 0], sizes = [8, 1], strides = [1, 1]} : vector<8x8xi32> to vector<8x1xi32>
    %10 = vector.broadcast %9 : vector<8x1xi32> to vector<8x128xi32>
    %11 = arith.cmpi eq, %4, %10 : vector<8x128xi32>
    %12 = arith.extui %11 : vector<8x128xi1> to vector<8x128xi32>
    %13 = arith.addi %8, %12 : vector<8x128xi32>
    %14 = vector.extract_strided_slice %7 {offsets = [0, 1], sizes = [8, 1], strides = [1, 1]} : vector<8x8xi32> to vector<8x1xi32>
    %15 = vector.broadcast %14 : vector<8x1xi32> to vector<8x128xi32>
    %16 = arith.cmpi eq, %4, %15 : vector<8x128xi32>
    %17 = arith.extui %16 : vector<8x128xi1> to vector<8x128xi32>
    %18 = arith.addi %13, %17 : vector<8x128xi32>
    %19 = vector.extract_strided_slice %7 {offsets = [0, 2], sizes = [8, 1], strides = [1, 1]} : vector<8x8xi32> to vector<8x1xi32>
    %20 = vector.broadcast %19 : vector<8x1xi32> to vector<8x128xi32>
    %21 = arith.cmpi eq, %4, %20 : vector<8x128xi32>
    %22 = arith.extui %21 : vector<8x128xi1> to vector<8x128xi32>
    %23 = arith.addi %18, %22 : vector<8x128xi32>
    %24 = vector.extract_strided_slice %7 {offsets = [0, 3], sizes = [8, 1], strides = [1, 1]} : vector<8x8xi32> to vector<8x1xi32>
    %25 = vector.broadcast %24 : vector<8x1xi32> to vector<8x128xi32>
    %26 = arith.cmpi eq, %4, %25 : vector<8x128xi32>
    %27 = arith.extui %26 : vector<8x128xi1> to vector<8x128xi32>
    %28 = arith.addi %23, %27 : vector<8x128xi32>
    %29 = vector.extract_strided_slice %7 {offsets = [0, 4], sizes = [8, 1], strides = [1, 1]} : vector<8x8xi32> to vector<8x1xi32>
    %30 = vector.broadcast %29 : vector<8x1xi32> to vector<8x128xi32>
    %31 = arith.cmpi eq, %4, %30 : vector<8x128xi32>
    %32 = arith.extui %31 : vector<8x128xi1> to vector<8x128xi32>
    %33 = arith.addi %28, %32 : vector<8x128xi32>
    %34 = vector.extract_strided_slice %7 {offsets = [0, 5], sizes = [8, 1], strides = [1, 1]} : vector<8x8xi32> to vector<8x1xi32>
    %35 = vector.broadcast %34 : vector<8x1xi32> to vector<8x128xi32>
    %36 = arith.cmpi eq, %4, %35 : vector<8x128xi32>
    %37 = arith.extui %36 : vector<8x128xi1> to vector<8x128xi32>
    %38 = arith.addi %33, %37 : vector<8x128xi32>
    %39 = vector.extract_strided_slice %7 {offsets = [0, 6], sizes = [8, 1], strides = [1, 1]} : vector<8x8xi32> to vector<8x1xi32>
    %40 = vector.broadcast %39 : vector<8x1xi32> to vector<8x128xi32>
    %41 = arith.cmpi eq, %4, %40 : vector<8x128xi32>
    %42 = arith.extui %41 : vector<8x128xi1> to vector<8x128xi32>
    %43 = arith.addi %38, %42 : vector<8x128xi32>
    %44 = vector.extract_strided_slice %7 {offsets = [0, 7], sizes = [8, 1], strides = [1, 1]} : vector<8x8xi32> to vector<8x1xi32>
    %45 = vector.broadcast %44 : vector<8x1xi32> to vector<8x128xi32>
    %46 = arith.cmpi eq, %4, %45 : vector<8x128xi32>
    %47 = arith.extui %46 : vector<8x128xi1> to vector<8x128xi32>
    %48 = arith.addi %43, %47 : vector<8x128xi32>
    %49 = arith.sitofp %48 : vector<8x128xi32> to vector<8x128xbf16>
    %c0_3 = arith.constant 0 : index
    %c0_4 = arith.constant 0 : index
    %50 = vector.load %arg7[%c0_3, %c0_4] : memref<8x128xf32, #tpu.memory_space<vmem>>, vector<8x128xf32>
    %c0_5 = arith.constant 0 : index
    %c0_6 = arith.constant 0 : index
    %51 = vector.load %arg3[%c0_5, %c0_6] : memref<128x128xbf16, #tpu.memory_space<vmem>>, vector<128x128xbf16>
    %cst = arith.constant dense<0.000000e+00> : vector<8x128xf32>
    %52 = tpu.matmul %49, %51, %cst {dimension_numbers = #tpu.dot_dimension_numbers<[1], [0], [0], [1], [0, 0, 1, 1], [], []>} : vector<8x128xbf16>, vector<128x128xbf16>, vector<8x128xf32> -> vector<8x128xf32>
    %53 = arith.addf %50, %52 : vector<8x128xf32>
    %c0_7 = arith.constant 0 : index
    %c0_8 = arith.constant 0 : index
    %54 = vector.load %arg7[%c0_7, %c0_8] : memref<8x128xf32, #tpu.memory_space<vmem>>, vector<8x128xf32>
    tpu.vector_store %arg7[%c0_7, %c0_8], %53 {strides = array<i32>} : memref<8x128xf32, #tpu.memory_space<vmem>>, vector<8x128xf32>,
    %c0_i32_9 = arith.constant 0 : i32
    %55 = arith.cmpi eq, %arg1, %c0_i32_9 : i32
    %56 = arith.extui %55 : i1 to i32
    %c0_i32_10 = arith.constant 0 : i32
    %57 = arith.cmpi ne, %56, %c0_i32_10 : i32
    scf.if %57 {
      %c0_11 = arith.constant 0 : index
      %c0_12 = arith.constant 0 : index
      %58 = vector.load %arg7[%c0_11, %c0_12] : memref<8x128xf32, #tpu.memory_space<vmem>>, vector<8x128xf32>
      %cst_13 = arith.constant 0.000000e+00 : f32
      %59 = vector.broadcast %cst_13 : f32 to vector<8x128xf32>
      %60 = arith.cmpf ogt, %58, %59 : vector<8x128xf32>
      %cst_14 = arith.constant 0.000000e+00 : f32
      %61 = vector.broadcast %cst_14 : f32 to vector<8x128xf32>
      %62 = arith.minimumf %58, %61 : vector<8x128xf32>
      %63 = math.exp %62 : vector<8x128xf32>
      %cst_15 = arith.constant 1.000000e+00 : f32
      %64 = vector.broadcast %cst_15 : f32 to vector<8x128xf32>
      %65 = arith.subf %63, %64 : vector<8x128xf32>
      %cst_16 = arith.constant 1.67326319 : f32
      %66 = vector.broadcast %cst_16 : f32 to vector<8x128xf32>
      %67 = arith.mulf %66, %65 : vector<8x128xf32>
      %68 = arith.select %60, %58, %67 : vector<8x128xi1>, vector<8x128xf32>
      %cst_17 = arith.constant 1.05070102 : f32
      %69 = vector.broadcast %cst_17 : f32 to vector<8x128xf32>
      %70 = arith.mulf %69, %68 : vector<8x128xf32>
      %71 = arith.truncf %70 : vector<8x128xf32> to vector<8x128xbf16>
      %c0_18 = arith.constant 0 : index
      %c0_19 = arith.constant 0 : index
      %72 = vector.load %arg4[%c0_18, %c0_19] : memref<128x128xbf16, #tpu.memory_space<vmem>>, vector<128x128xbf16>
      %cst_20 = arith.constant dense<0.000000e+00> : vector<8x128xf32>
      %73 = tpu.matmul %71, %72, %cst_20 {dimension_numbers = #tpu.dot_dimension_numbers<[1], [0], [0], [1], [0, 0, 1, 1], [], []>} : vector<8x128xbf16>, vector<128x128xbf16>, vector<8x128xf32> -> vector<8x128xf32>
      %c0_21 = arith.constant 0 : index
      %c0_22 = arith.constant 0 : index
      %74 = vector.load %arg5[%c0_21, %c0_22] : memref<1x128xf32, #tpu.memory_space<vmem>>, vector<1x128xf32>
      %75 = vector.broadcast %74 : vector<1x128xf32> to vector<8x128xf32>
      %76 = arith.addf %73, %75 : vector<8x128xf32>
      %c0_23 = arith.constant 0 : index
      %c0_24 = arith.constant 0 : index
      %77 = vector.load %arg6[%c0_23, %c0_24] : memref<8x128xf32, #tpu.memory_space<vmem>>, vector<8x128xf32>
      tpu.vector_store %arg6[%c0_23, %c0_24], %76 {strides = array<i32>} : memref<8x128xf32, #tpu.memory_space<vmem>>, vector<8x128xf32>,
    } else {
    }
    return
  }
  func.func @transform_0(%arg0: i32, %arg1: i32) -> (i32, i32) {
    %c0_i32 = arith.constant 0 : i32
    %c0_i32_0 = arith.constant 0 : i32
    return %arg0, %c0_i32 : i32, i32
  }
  func.func @transform_1(%arg0: i32, %arg1: i32) -> (i32, i32) {
    %c0_i32 = arith.constant 0 : i32
    %c0_i32_0 = arith.constant 0 : i32
    return %arg1, %c0_i32 : i32, i32
  }
  func.func @transform_2(%arg0: i32, %arg1: i32) -> (i32, i32) {
    %c0_i32 = arith.constant 0 : i32
    %c0_i32_0 = arith.constant 0 : i32
    %c0_i32_1 = arith.constant 0 : i32
    return %c0_i32, %c0_i32_0 : i32, i32
  }
  func.func @transform_3(%arg0: i32, %arg1: i32) -> (i32, i32) {
    %c0_i32 = arith.constant 0 : i32
    %c0_i32_0 = arith.constant 0 : i32
    %c0_i32_1 = arith.constant 0 : i32
    return %c0_i32, %c0_i32_0 : i32, i32
  }
  func.func @transform_4(%arg0: i32, %arg1: i32) -> (i32, i32) {
    %c0_i32 = arith.constant 0 : i32
    %c0_i32_0 = arith.constant 0 : i32
    return %arg0, %c0_i32 : i32, i32
  }
}

</mosaic_0001>

<llo_original>
// kernel: tpu_custom_call.1
$region0: #{tpu_custom_call.1}
  #allocation0 [shape = 'u32[]', space=smem, size = 0x4, offset = 0x4, fixed_abs, tag = 'smem constant byte address 0x4 - core index']
  #allocation1 [shape = 'u32[144,128]{1,0:T(1,128)}', space=vmem, size = 0x12000, scoped, tag = 'internal scratch']
  #allocation2 [shape = 'f32[8,128]{1,0:T(8,128)}', space=vmem, size = 0x1000, scoped, tag = 'scratch operand']
  %s0 = inlined_call_operand.hbm [shape: s32[8,8], index: 0, kind: input, shape index: {}]
  %s1 = inlined_call_operand.hbm [shape: bf16[128,128], index: 1, kind: input, shape index: {}]
  %s2 = inlined_call_operand.hbm [shape: bf16[128,128], index: 2, kind: input, shape index: {}]
  %s3 = inlined_call_operand.vmem [shape: f32[1,128], index: 3, kind: input, shape index: {}]
  %s4 = inlined_call_operand.hbm [shape: f32[8,128], index: 4, kind: output, shape index: {}]
  %s5 = sld [smem:[#allocation0]]
  $region46: #{tpu_custom_call.1} parent=0
    _
  %s7 = ssub.s32 1, %s5
  %s8 = scalar_select 0, %s7, %s5
  $region1: #{tpu_custom_call.1} parent=0
    #allocation3 [shape = 'u8[4096]{0}', space=vmem, size = 0x1000, scoped, tag = 'input window, operand 0, single buffered']
    #allocation4 [shape = 's32[1]{0}', space=sflag, size = 0x4, scoped, tag = 'scoped memory for tpu_custom_call.1']
    #allocation5 [shape = 's32[1]{0}', space=sflag, size = 0x4, scoped, tag = 'scoped memory for tpu_custom_call.1']
    #allocation6 [shape = 'u8[32768]{0}', space=vmem, size = 0x8000, scoped, tag = 'input window, operand 1, single buffered']
    #allocation7 [shape = 's32[1]{0}', space=sflag, size = 0x4, scoped, tag = 'scoped memory for tpu_custom_call.1']
    #allocation8 [shape = 'u8[32768]{0}', space=vmem, size = 0x8000, scoped, tag = 'input window, operand 2, single buffered']
    #allocation9 [shape = 'u8[4096]{0}', space=vmem, size = 0x1000, scoped, tag = 'output window, operand 0, single buffered']
    %9 = vsyncpa [#allocation4], 0
    %10 = vsyncpa [#allocation7], 0
    %11 = vsyncpa [#allocation5], 0
    // Predicated region
    $region2: #{tpu_custom_call.1} parent=1 // pred_check
      _
    $region3: #{tpu_custom_call.1} parent=1 // pred_check_branch
      %13 = sbr.rel (0) target = $region5
    $region4: #{tpu_custom_call.1} parent=1 // pred_region
      %s15 = ssub.s32 128, 128
      %16 = vsyncadd [#allocation4], %s15
      %s18 = sshll.u32 [#allocation3], 4
      %s19 = int_to_ptr.vmem [resolvable:$true] %s18
      %21 = dma.hbm_to_vmem [thread:$0]  %s0, 128, %s19, [#allocation4]
    $region5: #{tpu_custom_call.1} parent=1 // pred_fallthru
      _
    // Predicated region
    $region6: #{tpu_custom_call.1} parent=1 // pred_check
      _
    $region7: #{tpu_custom_call.1} parent=1 // pred_check_branch
      %23 = sbr.rel (0) target = $region9
    $region8: #{tpu_custom_call.1} parent=1 // pred_region
      %s25 = ssub.s32 1024, 1024
      %26 = vsyncadd [#allocation7], %s25
      %s27 = sshll.u32 [#allocation6], 4
      %s28 = int_to_ptr.vmem [resolvable:$true] %s27
      %33 = dma.hbm_to_vmem [thread:$0]  %s1, 1024, %s28, [#allocation7], 64, 64, 4
    $region9: #{tpu_custom_call.1} parent=1 // pred_fallthru
      _
    // Predicated region
    $region10: #{tpu_custom_call.1} parent=1 // pred_check
      _
    $region11: #{tpu_custom_call.1} parent=1 // pred_check_branch
      %35 = sbr.rel (0) target = $region13
    $region12: #{tpu_custom_call.1} parent=1 // pred_region
      %s37 = ssub.s32 1024, 1024
      %38 = vsyncadd [#allocation7], %s37
      %s39 = sshll.u32 [#allocation8], 4
      %s40 = int_to_ptr.vmem [resolvable:$true] %s39
      %45 = dma.hbm_to_vmem [thread:$0]  %s2, 1024, %s40, [#allocation7], 64, 64, 4
    $region13: #{tpu_custom_call.1} parent=1 // pred_fallthru
      _
    // Predicated region
    $region14: #{tpu_custom_call.1} parent=1 // pred_check
      _
    $region15: #{tpu_custom_call.1} parent=1 // pred_check_branch
      %47 = sbr.rel (0) target = $region17
    $region16: #{tpu_custom_call.1} parent=1 // pred_region
      _
    $region17: #{tpu_custom_call.1} parent=1 // pred_fallthru
      _
    // Predicated region
    $region18: #{tpu_custom_call.1} parent=1 // pred_check
      _
    $region19: #{tpu_custom_call.1} parent=1 // pred_check_branch
      %49 = sbr.rel (0) target = $region21
    $region20: #{tpu_custom_call.1} parent=1 // pred_region
      %50 = dma.done [#allocation4], 128
    $region21: #{tpu_custom_call.1} parent=1 // pred_fallthru
      _
    // Predicated region
    $region22: #{tpu_custom_call.1} parent=1 // pred_check
      _
    $region23: #{tpu_custom_call.1} parent=1 // pred_check_branch
      %52 = sbr.rel (0) target = $region25
    $region24: #{tpu_custom_call.1} parent=1 // pred_region
      %53 = dma.done [#allocation7], 1024
    $region25: #{tpu_custom_call.1} parent=1 // pred_fallthru
      _
    // Predicated region
    $region26: #{tpu_custom_call.1} parent=1 // pred_check
      _
    $region27: #{tpu_custom_call.1} parent=1 // pred_check_branch
      %55 = sbr.rel (0) target = $region29
    $region28: #{tpu_custom_call.1} parent=1 // pred_region
      %56 = dma.done [#allocation7], 1024
    $region29: #{tpu_custom_call.1} parent=1 // pred_fallthru
      _
    %p58 = scmp.eq.s32.totalorder 0, 0
    // Predicated region
    $region30: #{tpu_custom_call.1} parent=1 // pred_check
      %p59 = pneg %p58
    $region31: #{tpu_custom_call.1} parent=1 // pred_check_branch
      %61 = sbr.rel (%p59) target = $region33
    $region32: #{tpu_custom_call.1} parent=1 // pred_region
      %62 = vst [vmem:[#allocation2] sm:$0xff] 0.0
    $region33: #{tpu_custom_call.1} parent=1 // pred_fallthru
      _
    %s63 = smul.u32 0, 128
    %v64 = vlaneseq
    %v65 = vand.u32 %v64, 127
    %v66 = vld [vmem:[#allocation3] sm:$0xff]
    %v67 = vstv %s63
    %v68 = vsub.s32 %v66, %v67
    %69 = vset.pattern.permute.xlu0 0
    %70 = vperm.xlu0 %69, %v68
    %v71 = vpop.permute.xlu0 %70
    %vm72 = vcmp.eq.s32.totalorder %v65, %v71
    %v73 = vsel %vm72, 1, 0
    %74 = vset.pattern.permute.xlu0 1
    %75 = vperm.xlu0 %74, %v68
    %v76 = vpop.permute.xlu0 %75
    %vm77 = vcmp.eq.s32.totalorder %v65, %v76
    %v78 = vsel %vm77, 1, 0
    %v79 = vadd.s32 %v73, %v78
    %80 = vset.pattern.permute.xlu0 2
    %81 = vperm.xlu0 %80, %v68
    %v82 = vpop.permute.xlu0 %81
    %vm83 = vcmp.eq.s32.totalorder %v65, %v82
    %v84 = vsel %vm83, 1, 0
    %v85 = vadd.s32 %v79, %v84
    %86 = vset.pattern.permute.xlu0 3
    %87 = vperm.xlu0 %86, %v68
    %v88 = vpop.permute.xlu0 %87
    %vm89 = vcmp.eq.s32.totalorder %v65, %v88
    %v90 = vsel %vm89, 1, 0
    %v91 = vadd.s32 %v85, %v90
    %92 = vset.pattern.permute.xlu0 4
    %93 = vperm.xlu0 %92, %v68
    %v94 = vpop.permute.xlu0 %93
    %vm95 = vcmp.eq.s32.totalorder %v65, %v94
    %v96 = vsel %vm95, 1, 0
    %v97 = vadd.s32 %v91, %v96
    %98 = vset.pattern.permute.xlu0 5
    %99 = vperm.xlu0 %98, %v68
    %v100 = vpop.permute.xlu0 %99
    %vm101 = vcmp.eq.s32.totalorder %v65, %v100
    %v102 = vsel %vm101, 1, 0
    %v103 = vadd.s32 %v97, %v102
    %104 = vset.pattern.permute.xlu0 6
    %105 = vperm.xlu0 %104, %v68
    %v106 = vpop.permute.xlu0 %105
    %vm107 = vcmp.eq.s32.totalorder %v65, %v106
    %v108 = vsel %vm107, 1, 0
    %v109 = vadd.s32 %v103, %v108
    %110 = vset.pattern.permute.xlu0 7
    %111 = vperm.xlu0 %110, %v68
    %v112 = vpop.permute.xlu0 %111
    %vm113 = vcmp.eq.s32.totalorder %v65, %v112
    %v114 = vsel %vm113, 1, 0
    %v115 = vadd.s32 %v109, %v114
    %v116 = vcvt.s32.f32 %v115
    %v117 = vpack.c.bf16 %v116, %v116
    %v118 = vld [vmem:[#allocation2] sm:$0xff]
    %v119 = vld [vmem:[#allocation6] sm:$0xf]
    %v120 = vld [vmem:[#allocation6 + $0x4] sm:$0xf]
    %v121 = vld [vmem:[#allocation6 + $0x8] sm:$0xf]
    %v122 = vld [vmem:[#allocation6 + $0xc] sm:$0xf]
    %v123 = vld [vmem:[#allocation6 + $0x10] sm:$0xf]
    %v124 = vld [vmem:[#allocation6 + $0x14] sm:$0xf]
    %v125 = vld [vmem:[#allocation6 + $0x18] sm:$0xf]
    %v126 = vld [vmem:[#allocation6 + $0x1c] sm:$0xf]
    %v127 = vld [vmem:[#allocation6 + $0x20] sm:$0xf]
    %v128 = vld [vmem:[#allocation6 + $0x24] sm:$0xf]
    %v129 = vld [vmem:[#allocation6 + $0x28] sm:$0xf]
    %v130 = vld [vmem:[#allocation6 + $0x2c] sm:$0xf]
    %v131 = vld [vmem:[#allocation6 + $0x30] sm:$0xf]
    %v132 = vld [vmem:[#allocation6 + $0x34] sm:$0xf]
    %v133 = vld [vmem:[#allocation6 + $0x38] sm:$0xf]
    %v134 = vld [vmem:[#allocation6 + $0x3c] sm:$0xf]
    %v151 = vunpack.c.l.b16 %v119
    %v152 = vunpack.c.l.b16 %v120
    %v153 = vunpack.c.l.b16 %v121
    %v154 = vunpack.c.l.b16 %v122
    %v155 = vunpack.c.l.b16 %v123
    %v156 = vunpack.c.l.b16 %v124
    %v157 = vunpack.c.l.b16 %v125
    %v158 = vunpack.c.l.b16 %v126
    %v159 = vunpack.c.l.b16 %v127
    %v160 = vunpack.c.l.b16 %v128
    %v161 = vunpack.c.l.b16 %v129
    %v162 = vunpack.c.l.b16 %v130
    %v163 = vunpack.c.l.b16 %v131
    %v164 = vunpack.c.l.b16 %v132
    %v165 = vunpack.c.l.b16 %v133
    %v166 = vunpack.c.l.b16 %v134
    %v167 = vpack.c.b16 %v152, %v151
    %v168 = vpack.c.b16 %v154, %v153
    %v169 = vpack.c.b16 %v156, %v155
    %v170 = vpack.c.b16 %v158, %v157
    %v171 = vpack.c.b16 %v160, %v159
    %v172 = vpack.c.b16 %v162, %v161
    %v173 = vpack.c.b16 %v164, %v163
    %v174 = vpack.c.b16 %v166, %v165
    %183 = vmatprep.subr.bf16.mxu0 0
    %184 = vmatpush1.bf16.msra.mxu0 %v174
    %185 = vmatprep.subr.bf16.mxu0 0
    %186 = vmatpush1.bf16.msra.mxu0 %v173
    %187 = vmatprep.subr.bf16.mxu0 0
    %188 = vmatpush1.bf16.msra.mxu0 %v172
    %189 = vmatprep.subr.bf16.mxu0 0
    %190 = vmatpush1.bf16.msra.mxu0 %v171
    %191 = vmatprep.subr.bf16.mxu0 0
    %192 = vmatpush1.bf16.msra.mxu0 %v170
    %193 = vmatprep.subr.bf16.mxu0 0
    %194 = vmatpush1.bf16.msra.mxu0 %v169
    %195 = vmatprep.subr.bf16.mxu0 0
    %196 = vmatpush1.bf16.msra.mxu0 %v168
    %197 = vmatprep.subr.bf16.mxu0 0
    %198 = vmatpush1.bf16.msra.mxu0 %v167
    %199 = vmatprep.subr.bf16.mxu0 0
    %200 = vmatpush2.bf16.msra.mxu0 0
    %201 = vmatprep.subr.bf16.mxu0 0
    %202 = vmatpush2.bf16.msra.mxu0 0
    %203 = vmatprep.subr.bf16.mxu0 0
    %204 = vmatpush2.bf16.msra.mxu0 0
    %205 = vmatprep.subr.bf16.mxu0 0
    %206 = vmatpush2.bf16.msra.mxu0 0
    %207 = vmatprep.subr.bf16.mxu0 0
    %208 = vmatpush2.bf16.msra.mxu0 0
    %209 = vmatprep.subr.bf16.mxu0 0
    %210 = vmatpush2.bf16.msra.mxu0 0
    %211 = vmatprep.subr.bf16.mxu0 0
    %212 = vmatpush2.bf16.msra.mxu0 0
    %213 = vmatprep.subr.bf16.mxu0 0
    %214 = vmatpush2.bf16.msra.mxu0 0
    %215 = vmatprep.mubr.bf16.mxu0 0
    %216 = vmatmul.mubr.bf16.gmra.mxu0 %v117
    %v217 = vpop.f32.mrf.mxu0
    %v218 = vadd.f32 0.0, %v217
    %v219 = vpop.f32.mrf.mxu0
    %v220 = vpop.f32.mrf.mxu0
    %v221 = vpop.f32.mrf.mxu0
    %222 = vdwg.mxu0
    %v223 = vadd.f32 %v118, %v218
    %224 = vst [vmem:[#allocation2] sm:$0xff] %v223
    // Predicated region
    $region34: #{tpu_custom_call.1} parent=1 // pred_check
      %p225 = pneg %p58
    $region35: #{tpu_custom_call.1} parent=1 // pred_check_branch
      %227 = sbr.rel (%p225) target = $region37
    $region36: #{tpu_custom_call.1} parent=1 // pred_region
      %v228 = vld [vmem:[#allocation2] sm:$0xff]
      %vm229 = vcmp.gt.f32.partialorder %v228, 0.0
      %v230 = vmin.f32 %v228, 0.0
      %v231 = vmul.f32 %v230, 1.442695
      %v232 = vpow.pop %v231
      %v233 = vsub.f32 %v232, 1.0
      %v234 = vmul.f32 %v233, 1.6732632
      %v235 = vsel %vm229, %v228, %v234
      %v236 = vmul.f32 %v235, 1.050701
      %v237 = vpack.c.bf16 %v236, %v236
      %v238 = vld [vmem:[#allocation8] sm:$0xf]
      %v239 = vld [vmem:[#allocation8 + $0x4] sm:$0xf]
      %v240 = vld [vmem:[#allocation8 + $0x8] sm:$0xf]
      %v241 = vld [vmem:[#allocation8 + $0xc] sm:$0xf]
      %v242 = vld [vmem:[#allocation8 + $0x10] sm:$0xf]
      %v243 = vld [vmem:[#allocation8 + $0x14] sm:$0xf]
      %v244 = vld [vmem:[#allocation8 + $0x18] sm:$0xf]
      %v245 = vld [vmem:[#allocation8 + $0x1c] sm:$0xf]
      %v246 = vld [vmem:[#allocation8 + $0x20] sm:$0xf]
      %v247 = vld [vmem:[#allocation8 + $0x24] sm:$0xf]
      %v248 = vld [vmem:[#allocation8 + $0x28] sm:$0xf]
      %v249 = vld [vmem:[#allocation8 + $0x2c] sm:$0xf]
      %v250 = vld [vmem:[#allocation8 + $0x30] sm:$0xf]
      %v251 = vld [vmem:[#allocation8 + $0x34] sm:$0xf]
      %v252 = vld [vmem:[#allocation8 + $0x38] sm:$0xf]
      %v253 = vld [vmem:[#allocation8 + $0x3c] sm:$0xf]
      %v254 = vld [vmem:[%s3] sm:$0x1]
      %v256 = vlaneseq
      %v257 = vshrl.u32 %v256, 7
      %v258 = vsub.s32 0, %v257
      %v259 = vrot.slane %v254, %v258
      %v277 = vunpack.c.l.b16 %v238
      %v278 = vunpack.c.l.b16 %v239
      %v279 = vunpack.c.l.b16 %v240
      %v280 = vunpack.c.l.b16 %v241
      %v281 = vunpack.c.l.b16 %v242
      %v282 = vunpack.c.l.b16 %v243
      %v283 = vunpack.c.l.b16 %v244
      %v284 = vunpack.c.l.b16 %v245
      %v285 = vunpack.c.l.b16 %v246
      %v286 = vunpack.c.l.b16 %v247
      %v287 = vunpack.c.l.b16 %v248
      %v288 = vunpack.c.l.b16 %v249
      %v289 = vunpack.c.l.b16 %v250
      %v290 = vunpack.c.l.b16 %v251
      %v291 = vunpack.c.l.b16 %v252
      %v292 = vunpack.c.l.b16 %v253
      %v293 = vpack.c.b16 %v278, %v277
      %v294 = vpack.c.b16 %v280, %v279
      %v295 = vpack.c.b16 %v282, %v281
      %v296 = vpack.c.b16 %v284, %v283
      %v297 = vpack.c.b16 %v286, %v285
      %v298 = vpack.c.b16 %v288, %v287
      %v299 = vpack.c.b16 %v290, %v289
      %v300 = vpack.c.b16 %v292, %v291
      %309 = vmatprep.subr.bf16.mxu0 0
      %310 = vmatpush1.bf16.msra.mxu0 %v300
      %311 = vmatprep.subr.bf16.mxu0 0
      %312 = vmatpush1.bf16.msra.mxu0 %v299
      %313 = vmatprep.subr.bf16.mxu0 0
      %314 = vmatpush1.bf16.msra.mxu0 %v298
      %315 = vmatprep.subr.bf16.mxu0 0
      %316 = vmatpush1.bf16.msra.mxu0 %v297
      %317 = vmatprep.subr.bf16.mxu0 0
      %318 = vmatpush1.bf16.msra.mxu0 %v296
      %319 = vmatprep.subr.bf16.mxu0 0
      %320 = vmatpush1.bf16.msra.mxu0 %v295
      %321 = vmatprep.subr.bf16.mxu0 0
      %322 = vmatpush1.bf16.msra.mxu0 %v294
      %323 = vmatprep.subr.bf16.mxu0 0
      %324 = vmatpush1.bf16.msra.mxu0 %v293
      %325 = vmatprep.subr.bf16.mxu0 0
      %326 = vmatpush2.bf16.msra.mxu0 0
      %327 = vmatprep.subr.bf16.mxu0 0
      %328 = vmatpush2.bf16.msra.mxu0 0
      %329 = vmatprep.subr.bf16.mxu0 0
      %330 = vmatpush2.bf16.msra.mxu0 0
      %331 = vmatprep.subr.bf16.mxu0 0
      %332 = vmatpush2.bf16.msra.mxu0 0
      %333 = vmatprep.subr.bf16.mxu0 0
      %334 = vmatpush2.bf16.msra.mxu0 0
      %335 = vmatprep.subr.bf16.mxu0 0
      %336 = vmatpush2.bf16.msra.mxu0 0
      %337 = vmatprep.subr.bf16.mxu0 0
      %338 = vmatpush2.bf16.msra.mxu0 0
      %339 = vmatprep.subr.bf16.mxu0 0
      %340 = vmatpush2.bf16.msra.mxu0 0
      %341 = vmatprep.mubr.bf16.mxu0 0
      %342 = vmatmul.mubr.bf16.gmra.mxu0 %v237
      %v343 = vpop.f32.mrf.mxu0
      %v344 = vadd.f32 %v259, %v343
      %v345 = vpop.f32.mrf.mxu0
      %v346 = vpop.f32.mrf.mxu0
      %v347 = vpop.f32.mrf.mxu0
      %348 = vdwg.mxu0
      %349 = vst [vmem:[#allocation9] sm:$0xff] %v344
    $region37: #{tpu_custom_call.1} parent=1 // pred_fallthru
      _
    // Predicated region
    $region38: #{tpu_custom_call.1} parent=1 // pred_check
      _
    $region39: #{tpu_custom_call.1} parent=1 // pred_check_branch
      %351 = sbr.rel (0) target = $region41
    $region40: #{tpu_custom_call.1} parent=1 // pred_region
      %s353 = ssub.s32 128, 128
      %354 = vsyncadd [#allocation5], %s353
      %s356 = sshll.u32 [#allocation9], 4
      %s357 = int_to_ptr.vmem [resolvable:$true] %s356
      %359 = dma.vmem_to_hbm [thread:$0]  %s357, 128, %s4, [#allocation5]
    $region41: #{tpu_custom_call.1} parent=1 // pred_fallthru
      _
    // Predicated region
    $region42: #{tpu_custom_call.1} parent=1 // pred_check
      _
    $region43: #{tpu_custom_call.1} parent=1 // pred_check_branch
      %361 = sbr.rel (0) target = $region45
    $region44: #{tpu_custom_call.1} parent=1 // pred_region
      %362 = dma.done [#allocation5], 128
    $region45: #{tpu_custom_call.1} parent=1 // pred_fallthru
      _
    %363 = vsyncpa [#allocation4], 1
    %364 = vsyncpa [#allocation7], 1
    %365 = vsyncpa [#allocation5], 1

</llo_original>
